<compile_context>
chip_gen: v5e
topology: v5e:2x2
jax: 0.10.0
libtpu: 0.0.40
codegen_flags: <defaults>
</compile_context>

<pallas_src>
import functools

import jax
import jax.numpy as jnp
from jax.experimental import pallas as pl
from jax.experimental.pallas import tpu as pltpu

LANE = 128
MXU_DTYPE = jnp.bfloat16      # set to jnp.float32 for bit-faithful numerics
TARGET_M = 256                # aim for >= 256 MXU rows per matmul (v6e/v7x)


# ------------------------------ small helpers -------------------------------

def _same_pad(length, kernel_size, stride):
    out_dim = (length + stride - 1) // stride
    p = max(0, (out_dim - 1) * stride + kernel_size - length)
    return p // 2, p - p // 2, out_dim


def _bn_affine(gamma, beta, mean, var, eps=1e-5):
    scale = gamma / jnp.sqrt(var + eps)
    shift = beta - mean * scale
    return scale, shift


def _round_up(v, m):
    return (v + m - 1) // m * m


def _pick_bb(B, L_out):
    """Batch elements per grid step so the MXU M dim is ~TARGET_M rows."""
    if L_out % 8 != 0:            # keep cross-batch row stacking sublane-aligned
        return 1
    bb = max(1, min(B, 32, -(-TARGET_M // L_out)))
    while B % bb:
        bb -= 1
    return bb


# ------------------------------ fused kernel --------------------------------

def _make_kernel(*, Bb, L, L_out, C_p, K, s,
                 pad1_l, pad2_l, pool_pad_l,
                 Lp1, Lp2, Lpool, Lp_max, is_first_block, do_pool):

    def kernel(x_ref, w1_ref, w2_ref, p_ref, o_ref, hp):
        # packed per-channel params: rows 0..5 = sc1, sh1, b1, sc2, sh2, b2
        sc1, sh1, b1 = p_ref[0:1, :], p_ref[1:2, :], p_ref[2:3, :]
        sc2, sh2, b2 = p_ref[3:4, :], p_ref[4:5, :], p_ref[5:6, :]

        base = [b * Lp_max for b in range(Bb)]

        def write_padded(b, value, pad_l, Lp, n_rows):
            """Store `value` (n_rows, C_p) into scratch region b, zeroing only
            the few pad rows (the interior is always fully overwritten)."""
            r0 = base[b]
            if pad_l > 0:
                hp[r0:r0 + pad_l, :] = jnp.zeros((pad_l, C_p), jnp.float32)
            pad_r = Lp - pad_l - n_rows
            if pad_r > 0:
                hp[r0 + pad_l + n_rows:r0 + Lp, :] = jnp.zeros((pad_r, C_p),
                                                               jnp.float32)
            hp[r0 + pad_l:r0 + pad_l + n_rows, :] = value

        def conv_matmul(stride, w_ref):
            """One fused im2col matmul over all Bb regions and all K taps."""
            rows = []
            for b in range(Bb):
                taps = []
                for k in range(K):
                    if stride == 1:
                        taps.append(hp[base[b] + k: base[b] + k + L_out, :])
                    else:
                        taps.append(
                            hp[pl.ds(base[b] + k, L_out, stride=stride), :])
                rows.append(taps[0] if K == 1
                            else jnp.concatenate(taps, axis=-1))   # (L_out, K*C_p)
            lhs = rows[0] if Bb == 1 else jnp.concatenate(rows, axis=0)
            return jnp.dot(lhs.astype(MXU_DTYPE), w_ref[...],
                           preferred_element_type=jnp.float32)     # (Bb*L_out, C_p)

        # ---- bn1 + relu1 -> SAME-padded scratch (skipped on the first block) ----
        for b in range(Bb):
            xb = x_ref[b]                                          # (L, C_p)
            h1b = xb if is_first_block else jnp.maximum(xb * sc1 + sh1, 0.0)
            write_padded(b, h1b, pad1_l, Lp1, L)

        # ---- conv1 (stride s) + bias1 + bn2 + relu2 ----
        acc1 = conv_matmul(s, w1_ref)
        h2 = jnp.maximum((acc1 + b1) * sc2 + sh2, 0.0)             # (Bb*L_out, C_p)

        # ---- conv2 (stride 1), same scratch buffer reused ----
        for b in range(Bb):
            write_padded(b, h2[b * L_out:(b + 1) * L_out, :], pad2_l, Lp2, L_out)
        acc2 = conv_matmul(1, w2_ref) + b2                         # (Bb*L_out, C_p)

        # ---- identity: SAME max-pool with zero pad (exactly like the module) ----
        for b in range(Bb):
            if do_pool:
                write_padded(b, x_ref[b], pool_pad_l, Lpool, L)
                ident = hp[pl.ds(base[b], L_out, stride=s), :]
                for r in range(1, s):
                    ident = jnp.maximum(
                        ident, hp[pl.ds(base[b] + r, L_out, stride=s), :])
            else:
                ident = x_ref[b]                                   # L_out == L
            o_ref[b] = acc2[b * L_out:(b + 1) * L_out, :] + ident

    return kernel


# --------------------------- parameter packing -------------------------------

def pack_basic_block_params(params, *, kernel_size, use_bn):
    """Pad / fold / cast the block parameters once.

    When chaining blocks, call this once per block (outside the per-step path)
    and reuse the result; it is pure layout plumbing."""
    C_out, C_in, K = params["w1"].shape
    assert K == kernel_size
    assert C_out >= C_in, "channel-cropping identity (C_out < C_in) unsupported"
    C_p = _round_up(max(C_in, C_out), LANE)
    ch1 = (C_out - C_in) // 2 if C_out != C_in else 0

    if use_bn:
        sc1, sh1 = _bn_affine(params["bn1_g"], params["bn1_b"],
                              params["bn1_m"], params["bn1_v"])
        sc2, sh2 = _bn_affine(params["bn2_g"], params["bn2_b"],
                              params["bn2_m"], params["bn2_v"])
    else:
        sc1 = jnp.ones((C_in,), jnp.float32)
        sh1 = jnp.zeros((C_in,), jnp.float32)
        sc2 = jnp.ones((C_out,), jnp.float32)
        sh2 = jnp.zeros((C_out,), jnp.float32)

    def row(v, off):
        return jnp.zeros((C_p,), jnp.float32).at[off:off + v.shape[0]].set(
            v.astype(jnp.float32))

    P = jnp.stack([row(sc1, ch1), row(sh1, ch1), row(params["b1"], 0),
                   row(sc2, 0), row(sh2, 0), row(params["b2"], 0),
                   jnp.zeros((C_p,), jnp.float32),
                   jnp.zeros((C_p,), jnp.float32)], axis=0)          # (8, C_p)

    # conv weights -> (K*C_p, C_p): W[k*C_p + ci_lane, co_lane]; bf16 for the MXU
    w1 = jnp.transpose(params["w1"].astype(jnp.float32), (2, 1, 0))  # (K, C_in, C_out)
    W1 = jnp.zeros((K, C_p, C_p), jnp.float32).at[:, ch1:ch1 + C_in, :C_out].set(w1)
    w2 = jnp.transpose(params["w2"].astype(jnp.float32), (2, 1, 0))  # (K, C_out, C_out)
    W2 = jnp.zeros((K, C_p, C_p), jnp.float32).at[:, :C_out, :C_out].set(w2)
    return dict(W1=W1.reshape(K * C_p, C_p).astype(MXU_DTYPE),
                W2=W2.reshape(K * C_p, C_p).astype(MXU_DTYPE),
                P=P, C_in=C_in, C_out=C_out, C_p=C_p, ch1=ch1, K=K)


# ------------------------ padded-layout entry point --------------------------

def basic_block_apply_padded(x_p, packed, *, stride, downsample, is_first_block):
    """x_p: (B, L, C_p) lane-padded NLC activations (original channels at lane
    offset ch1).  Returns (B, L_out, C_p) in the same layout (next block's
    input) -- chain blocks in this layout to avoid HBM layout round trips."""
    B, L, C_p = x_p.shape
    K = packed["K"]
    s = stride if downsample else 1

    pad1_l, pad1_r, L_out = _same_pad(L, K, s)
    Lp1 = L + pad1_l + pad1_r
    pad2_l, pad2_r, _ = _same_pad(L_out, K, 1)
    Lp2 = L_out + pad2_l + pad2_r
    do_pool = bool(downsample and s > 1)
    pool_pad_l = (s - 1) // 2
    Lpool = L + s - 1
    Lp_max = max(Lp1, Lp2, Lpool if do_pool else 0)

    Bb = _pick_bb(B, L_out)
    grid = (B // Bb,)

    kernel = _make_kernel(Bb=Bb, L=L, L_out=L_out, C_p=C_p, K=K, s=s,
                          pad1_l=pad1_l, pad2_l=pad2_l, pool_pad_l=pool_pad_l,
                          Lp1=Lp1, Lp2=Lp2, Lpool=Lpool, Lp_max=Lp_max,
                          is_first_block=is_first_block, do_pool=do_pool)

    # explicit VMEM budget: double-buffered activation/output blocks, resident
    # bf16 weights (x2 pipeline buffers), packed params, the single shared
    # padded scratch, plus headroom for the in-kernel im2col values.
    est = (2 * Bb * L * C_p * 4
           + 2 * Bb * L_out * C_p * 4
           + 2 * 2 * K * C_p * C_p * 2
           + 2 * 8 * C_p * 4
           + Bb * Lp_max * C_p * 4
           + 2 * Bb * L_out * K * C_p * 4)
    vmem_limit = int(min(max(4 * est, 8 << 20), 48 << 20))

    return pl.pallas_call(
        kernel,
        out_shape=jax.ShapeDtypeStruct((B, L_out, C_p), jnp.float32),
        grid_spec=pltpu.PrefetchScalarGridSpec(
            num_scalar_prefetch=0,
            grid=grid,
            in_specs=[
                pl.BlockSpec((Bb, L, C_p), lambda i: (i, 0, 0)),     # activations
                pl.BlockSpec((K * C_p, C_p), lambda i: (0, 0)),      # W1 (resident)
                pl.BlockSpec((K * C_p, C_p), lambda i: (0, 0)),      # W2 (resident)
                pl.BlockSpec((8, C_p), lambda i: (0, 0)),            # packed params
            ],
            out_specs=pl.BlockSpec((Bb, L_out, C_p), lambda i: (i, 0, 0)),
            scratch_shapes=[
                pltpu.VMEM((Bb * Lp_max, C_p), jnp.float32),   # shared pad scratch
            ],
        ),
        compiler_params=pltpu.CompilerParams(
            dimension_semantics=("parallel",),                 # batch across TCs
            vmem_limit_bytes=vmem_limit,
        ),
    )(x_p, packed["W1"], packed["W2"], packed["P"])


# ----------------------------- NCL convenience --------------------------------

def basic_block_forward(x, params, *, kernel_size, stride, groups=1,
                        downsample, use_bn, use_do, is_first_block):
    """Eval-mode BasicBlock forward.  x: (B, C_in, L) NCL float32.

    For multi-block networks, hoist pack_basic_block_params() and chain
    basic_block_apply_padded() on the lane-padded NLC activations instead of
    using this wrapper, so the transposes/paddings below never hit HBM."""
    del use_do                                # dropout is identity in eval mode
    assert groups == 1, "grouped conv not implemented"  # TODO(synk)
    B, C_in, L = x.shape
    packed = pack_basic_block_params(params, kernel_size=kernel_size,
                                     use_bn=use_bn)
    assert packed["C_in"] == C_in
    C_out, C_p, ch1 = packed["C_out"], packed["C_p"], packed["ch1"]

    x_nlc = jnp.transpose(x.astype(jnp.float32), (0, 2, 1))           # (B, L, C_in)
    x_p = jnp.zeros((B, L, C_p), jnp.float32).at[:, :, ch1:ch1 + C_in].set(x_nlc)

    out_p = basic_block_apply_padded(x_p, packed, stride=stride,
                                     downsample=downsample,
                                     is_first_block=is_first_block)
    return jnp.transpose(out_p[:, :, :C_out], (0, 2, 1))              # (B, C_out, L_out)


# --------------------------- pure-JAX reference -----------------------------

def _ref_conv1d_same(x, w, bias, stride):
    K = w.shape[-1]
    padl, padr, _ = _same_pad(x.shape[-1], K, stride)
    xp = jnp.pad(x, ((0, 0), (0, 0), (padl, padr)))
    y = jax.lax.conv_general_dilated(xp, w, window_strides=(stride,),
                                     padding="VALID",
                                     dimension_numbers=("NCH", "OIH", "NCH"))
    return y + bias[None, :, None]


def _ref_maxpool_same(x, k):
    # matches MyMaxPool1dPadSame: constant-0 pad (k-1 total), MaxPool1d(k) stride=k
    L = x.shape[-1]
    p = max(0, (L - 1) + k - L)
    xp = jnp.pad(x, ((0, 0), (0, 0), (p // 2, p - p // 2)))
    n = (xp.shape[-1] - k) // k + 1
    wins = jnp.stack([xp[:, :, r: r + k * (n - 1) + 1: k] for r in range(k)], -1)
    return jnp.max(wins, axis=-1)


def _ref_forward(x, params, *, kernel_size, stride, downsample, use_bn,
                 is_first_block):
    B, C_in, L = x.shape
    C_out = params["w1"].shape[0]
    s = stride if downsample else 1
    out = x
    if not is_first_block:
        if use_bn:
            sc, sh = _bn_affine(params["bn1_g"], params["bn1_b"],
                                params["bn1_m"], params["bn1_v"])
            out = out * sc[None, :, None] + sh[None, :, None]
        out = jnp.maximum(out, 0.0)
    out = _ref_conv1d_same(out, params["w1"], params["b1"], s)
    if use_bn:
        sc, sh = _bn_affine(params["bn2_g"], params["bn2_b"],
                            params["bn2_m"], params["bn2_v"])
        out = out * sc[None, :, None] + sh[None, :, None]
    out = jnp.maximum(out, 0.0)
    out = _ref_conv1d_same(out, params["w2"], params["b2"], 1)
    identity = x
    if downsample:
        identity = _ref_maxpool_same(identity, s)
    if C_out != C_in:
        ch1 = (C_out - C_in) // 2
        ch2 = C_out - C_in - ch1
        identity = jnp.pad(identity, ((0, 0), (ch1, ch2), (0, 0)))
    return out + identity


# ----------------------------------- main ------------------------------------

if __name__ == "__main__":
    B, C_in, C_out, L, K, STRIDE = 2, 4, 8, 16, 3, 2
    key = jax.random.PRNGKey(0)
    ks = jax.random.split(key, 5)
    x = jax.random.normal(ks[0], (B, C_in, L), jnp.float32)

    bnd1 = 1.0 / (C_in * K) ** 0.5
    bnd2 = 1.0 / (C_out * K) ** 0.5
    params = dict(
        w1=jax.random.uniform(ks[1], (C_out, C_in, K), jnp.float32, -bnd1, bnd1),
        b1=jax.random.uniform(ks[2], (C_out,), jnp.float32, -bnd1, bnd1),
        w2=jax.random.uniform(ks[3], (C_out, C_out, K), jnp.float32, -bnd2, bnd2),
        b2=jax.random.uniform(ks[4], (C_out,), jnp.float32, -bnd2, bnd2),
        bn1_g=1.0 + 0.10 * jnp.arange(C_in, dtype=jnp.float32),
        bn1_b=0.05 * jnp.arange(C_in, dtype=jnp.float32),
        bn1_m=0.01 * jnp.arange(C_in, dtype=jnp.float32),
        bn1_v=1.0 + 0.05 * jnp.arange(C_in, dtype=jnp.float32),
        bn2_g=1.0 - 0.02 * jnp.arange(C_out, dtype=jnp.float32),
        bn2_b=-0.03 * jnp.arange(C_out, dtype=jnp.float32),
        bn2_m=0.02 * jnp.arange(C_out, dtype=jnp.float32),
        bn2_v=1.0 + 0.03 * jnp.arange(C_out, dtype=jnp.float32),
    )

    fwd = jax.jit(functools.partial(
        basic_block_forward, kernel_size=K, stride=STRIDE, groups=1,
        downsample=True, use_bn=True, use_do=False, is_first_block=False))
    out = jax.block_until_ready(fwd(x, params))
    assert out.shape == (B, C_out, (L + STRIDE - 1) // STRIDE), out.shape

    # sanity check against a pure-JAX reference (loose tol: bf16 MXU inputs)
    ref = _ref_forward(x, params, kernel_size=K, stride=STRIDE,
                       downsample=True, use_bn=True, is_first_block=False)
    err = float(jnp.max(jnp.abs(out - ref)))
    tol = 0.05 * (1.0 + float(jnp.max(jnp.abs(ref))))
    assert err <= tol, f"max abs error {err} > {tol}"

    print("KERNEL_OK")
</pallas_src>

<mosaic_0001>
module attributes {stable_mosaic.version = 11 : i64} {
  func.func @kernel(%arg0: i32, %arg1: memref<2x16x128xf32, #tpu.memory_space<vmem>>, %arg2: memref<384x128xbf16, #tpu.memory_space<vmem>>, %arg3: memref<384x128xbf16, #tpu.memory_space<vmem>>, %arg4: memref<8x128xf32, #tpu.memory_space<vmem>>, %arg5: memref<2x8x128xf32, #tpu.memory_space<vmem>>, %arg6: memref<34x128xf32, #tpu.memory_space<vmem>>) attributes {dimension_semantics = [#tpu.dimension_semantics<parallel>], iteration_bounds = array<i64: 1>, scalar_prefetch = 0 : i64, scratch_operands = 1 : i64, tpu.core_type = #tpu.core_type<tc>, window_params = [{transform_indices = @transform_0, window_bounds = array<i64: 2, 16, 128>}, {pipeline_mode = #tpu.pipeline_mode<synchronous>, transform_indices = @transform_1, window_bounds = array<i64: 384, 128>}, {pipeline_mode = #tpu.pipeline_mode<synchronous>, transform_indices = @transform_2, window_bounds = array<i64: 384, 128>}, {pipeline_mode = #tpu.pipeline_mode<synchronous>, transform_indices = @transform_3, window_bounds = array<i64: 8, 128>}, {transform_indices = @transform_4, window_bounds = array<i64: 2, 8, 128>}]} {
    %c0 = arith.constant 0 : index
    %c0_0 = arith.constant 0 : index
    %0 = vector.load %arg4[%c0, %c0_0] : memref<8x128xf32, #tpu.memory_space<vmem>>, vector<1x128xf32>
    %c1 = arith.constant 1 : index
    %c0_1 = arith.constant 0 : index
    %1 = vector.load %arg4[%c1, %c0_1] : memref<8x128xf32, #tpu.memory_space<vmem>>, vector<1x128xf32>
    %c2 = arith.constant 2 : index
    %c0_2 = arith.constant 0 : index
    %2 = vector.load %arg4[%c2, %c0_2] : memref<8x128xf32, #tpu.memory_space<vmem>>, vector<1x128xf32>
    %c3 = arith.constant 3 : index
    %c0_3 = arith.constant 0 : index
    %3 = vector.load %arg4[%c3, %c0_3] : memref<8x128xf32, #tpu.memory_space<vmem>>, vector<1x128xf32>
    %c4 = arith.constant 4 : index
    %c0_4 = arith.constant 0 : index
    %4 = vector.load %arg4[%c4, %c0_4] : memref<8x128xf32, #tpu.memory_space<vmem>>, vector<1x128xf32>
    %c5 = arith.constant 5 : index
    %c0_5 = arith.constant 0 : index
    %5 = vector.load %arg4[%c5, %c0_5] : memref<8x128xf32, #tpu.memory_space<vmem>>, vector<1x128xf32>
    %c0_6 = arith.constant 0 : index
    %c0_7 = arith.constant 0 : index
    %c0_8 = arith.constant 0 : index
    %6 = vector.load %arg1[%c0_6, %c0_7, %c0_8] : memref<2x16x128xf32, #tpu.memory_space<vmem>>, vector<1x16x128xf32>
    %7 = vector.shape_cast %6 : vector<1x16x128xf32> to vector<16x128xf32>
    %8 = vector.broadcast %0 : vector<1x128xf32> to vector<16x128xf32>
    %9 = arith.mulf %7, %8 : vector<16x128xf32>
    %10 = vector.broadcast %1 : vector<1x128xf32> to vector<16x128xf32>
    %11 = arith.addf %9, %10 : vector<16x128xf32>
    %cst = arith.constant 0.000000e+00 : f32
    %12 = vector.broadcast %cst : f32 to vector<16x128xf32>
    %13 = arith.maximumf %11, %12 : vector<16x128xf32>
    %cst_9 = arith.constant 0.000000e+00 : f32
    %14 = vector.broadcast %cst_9 : f32 to vector<1x128xf32>
    %c16 = arith.constant 16 : index
    %c0_10 = arith.constant 0 : index
    %15 = vector.load %arg6[%c16, %c0_10] : memref<34x128xf32, #tpu.memory_space<vmem>>, vector<1x128xf32>
    tpu.vector_store %arg6[%c16, %c0_10], %14 {strides = array<i32>} : memref<34x128xf32, #tpu.memory_space<vmem>>, vector<1x128xf32>,
    %c0_11 = arith.constant 0 : index
    %c0_12 = arith.constant 0 : index
    %16 = vector.load %arg6[%c0_11, %c0_12] : memref<34x128xf32, #tpu.memory_space<vmem>>, vector<16x128xf32>
    tpu.vector_store %arg6[%c0_11, %c0_12], %13 {strides = array<i32>} : memref<34x128xf32, #tpu.memory_space<vmem>>, vector<16x128xf32>,
    %c1_13 = arith.constant 1 : index
    %c0_14 = arith.constant 0 : index
    %c0_15 = arith.constant 0 : index
    %17 = vector.load %arg1[%c1_13, %c0_14, %c0_15] : memref<2x16x128xf32, #tpu.memory_space<vmem>>, vector<1x16x128xf32>
    %18 = vector.shape_cast %17 : vector<1x16x128xf32> to vector<16x128xf32>
    %19 = vector.broadcast %0 : vector<1x128xf32> to vector<16x128xf32>
    %20 = arith.mulf %18, %19 : vector<16x128xf32>
    %21 = vector.broadcast %1 : vector<1x128xf32> to vector<16x128xf32>
    %22 = arith.addf %20, %21 : vector<16x128xf32>
    %cst_16 = arith.constant 0.000000e+00 : f32
    %23 = vector.broadcast %cst_16 : f32 to vector<16x128xf32>
    %24 = arith.maximumf %22, %23 : vector<16x128xf32>
    %cst_17 = arith.constant 0.000000e+00 : f32
    %25 = vector.broadcast %cst_17 : f32 to vector<1x128xf32>
    %c33 = arith.constant 33 : index
    %c0_18 = arith.constant 0 : index
    %26 = vector.load %arg6[%c33, %c0_18] : memref<34x128xf32, #tpu.memory_space<vmem>>, vector<1x128xf32>
    tpu.vector_store %arg6[%c33, %c0_18], %25 {strides = array<i32>} : memref<34x128xf32, #tpu.memory_space<vmem>>, vector<1x128xf32>,
    %c17 = arith.constant 17 : index
    %c0_19 = arith.constant 0 : index
    %27 = vector.load %arg6[%c17, %c0_19] : memref<34x128xf32, #tpu.memory_space<vmem>>, vector<16x128xf32>
    tpu.vector_store %arg6[%c17, %c0_19], %24 {strides = array<i32>} : memref<34x128xf32, #tpu.memory_space<vmem>>, vector<16x128xf32>,
    %c0_20 = arith.constant 0 : index
    %c0_21 = arith.constant 0 : index
    %28 = tpu.strided_load %arg6[%c0_20, %c0_21] {strides = array<i32: 2, 1>} : memref<34x128xf32, #tpu.memory_space<vmem>>, vector<8x128xf32>
    %c1_22 = arith.constant 1 : index
    %c0_23 = arith.constant 0 : index
    %29 = tpu.strided_load %arg6[%c1_22, %c0_23] {strides = array<i32: 2, 1>} : memref<34x128xf32, #tpu.memory_space<vmem>>, vector<8x128xf32>
    %c2_24 = arith.constant 2 : index
    %c0_25 = arith.constant 0 : index
    %30 = tpu.strided_load %arg6[%c2_24, %c0_25] {strides = array<i32: 2, 1>} : memref<34x128xf32, #tpu.memory_space<vmem>>, vector<8x128xf32>
    %31 = tpu.concatenate %28, %29, %30 in 1 : vector<8x128xf32>, vector<8x128xf32>, vector<8x128xf32> -> vector<8x384xf32>
    %c17_26 = arith.constant 17 : index
    %c0_27 = arith.constant 0 : index
    %32 = tpu.strided_load %arg6[%c17_26, %c0_27] {strides = array<i32: 2, 1>} : memref<34x128xf32, #tpu.memory_space<vmem>>, vector<8x128xf32>
    %c18 = arith.constant 18 : index
    %c0_28 = arith.constant 0 : index
    %33 = tpu.strided_load %arg6[%c18, %c0_28] {strides = array<i32: 2, 1>} : memref<34x128xf32, #tpu.memory_space<vmem>>, vector<8x128xf32>
    %c19 = arith.constant 19 : index
    %c0_29 = arith.constant 0 : index
    %34 = tpu.strided_load %arg6[%c19, %c0_29] {strides = array<i32: 2, 1>} : memref<34x128xf32, #tpu.memory_space<vmem>>, vector<8x128xf32>
    %35 = tpu.concatenate %32, %33, %34 in 1 : vector<8x128xf32>, vector<8x128xf32>, vector<8x128xf32> -> vector<8x384xf32>
    %36 = tpu.concatenate %31, %35 in 0 : vector<8x384xf32>, vector<8x384xf32> -> vector<16x384xf32>
    %37 = arith.truncf %36 : vector<16x384xf32> to vector<16x384xbf16>
    %c0_30 = arith.constant 0 : index
    %c0_31 = arith.constant 0 : index
    %38 = vector.load %arg2[%c0_30, %c0_31] : memref<384x128xbf16, #tpu.memory_space<vmem>>, vector<384x128xbf16>
    %cst_32 = arith.constant dense<0.000000e+00> : vector<16x128xf32>
    %39 = tpu.matmul %37, %38, %cst_32 {dimension_numbers = #tpu.dot_dimension_numbers<[1], [0], [0], [1], [0, 0, 1, 1], [], []>} : vector<16x384xbf16>, vector<384x128xbf16>, vector<16x128xf32> -> vector<16x128xf32>
    %40 = vector.broadcast %2 : vector<1x128xf32> to vector<16x128xf32>
    %41 = arith.addf %39, %40 : vector<16x128xf32>
    %42 = vector.broadcast %3 : vector<1x128xf32> to vector<16x128xf32>
    %43 = arith.mulf %41, %42 : vector<16x128xf32>
    %44 = vector.broadcast %4 : vector<1x128xf32> to vector<16x128xf32>
    %45 = arith.addf %43, %44 : vector<16x128xf32>
    %cst_33 = arith.constant 0.000000e+00 : f32
    %46 = vector.broadcast %cst_33 : f32 to vector<16x128xf32>
    %47 = arith.maximumf %45, %46 : vector<16x128xf32>
    %48 = vector.extract_strided_slice %47 {offsets = [0, 0], sizes = [8, 128], strides = [1, 1]} : vector<16x128xf32> to vector<8x128xf32>
    %cst_34 = arith.constant 0.000000e+00 : f32
    %49 = vector.broadcast %cst_34 : f32 to vector<1x128xf32>
    %c0_35 = arith.constant 0 : index
    %c0_36 = arith.constant 0 : index
    %50 = vector.load %arg6[%c0_35, %c0_36] : memref<34x128xf32, #tpu.memory_space<vmem>>, vector<1x128xf32>
    tpu.vector_store %arg6[%c0_35, %c0_36], %49 {strides = array<i32>} : memref<34x128xf32, #tpu.memory_space<vmem>>, vector<1x128xf32>,
    %cst_37 = arith.constant 0.000000e+00 : f32
    %51 = vector.broadcast %cst_37 : f32 to vector<1x128xf32>
    %c9 = arith.constant 9 : index
    %c0_38 = arith.constant 0 : index
    %52 = vector.load %arg6[%c9, %c0_38] : memref<34x128xf32, #tpu.memory_space<vmem>>, vector<1x128xf32>
    tpu.vector_store %arg6[%c9, %c0_38], %51 {strides = array<i32>} : memref<34x128xf32, #tpu.memory_space<vmem>>, vector<1x128xf32>,
    %c1_39 = arith.constant 1 : index
    %c0_40 = arith.constant 0 : index
    %53 = vector.load %arg6[%c1_39, %c0_40] : memref<34x128xf32, #tpu.memory_space<vmem>>, vector<8x128xf32>
    tpu.vector_store %arg6[%c1_39, %c0_40], %48 {strides = array<i32>} : memref<34x128xf32, #tpu.memory_space<vmem>>, vector<8x128xf32>,
    %54 = vector.extract_strided_slice %47 {offsets = [8, 0], sizes = [8, 128], strides = [1, 1]} : vector<16x128xf32> to vector<8x128xf32>
    %cst_41 = arith.constant 0.000000e+00 : f32
    %55 = vector.broadcast %cst_41 : f32 to vector<1x128xf32>
    %c17_42 = arith.constant 17 : index
    %c0_43 = arith.constant 0 : index
    %56 = vector.load %arg6[%c17_42, %c0_43] : memref<34x128xf32, #tpu.memory_space<vmem>>, vector<1x128xf32>
    tpu.vector_store %arg6[%c17_42, %c0_43], %55 {strides = array<i32>} : memref<34x128xf32, #tpu.memory_space<vmem>>, vector<1x128xf32>,
    %cst_44 = arith.constant 0.000000e+00 : f32
    %57 = vector.broadcast %cst_44 : f32 to vector<1x128xf32>
    %c26 = arith.constant 26 : index
    %c0_45 = arith.constant 0 : index
    %58 = vector.load %arg6[%c26, %c0_45] : memref<34x128xf32, #tpu.memory_space<vmem>>, vector<1x128xf32>
    tpu.vector_store %arg6[%c26, %c0_45], %57 {strides = array<i32>} : memref<34x128xf32, #tpu.memory_space<vmem>>, vector<1x128xf32>,
    %c18_46 = arith.constant 18 : index
    %c0_47 = arith.constant 0 : index
    %59 = vector.load %arg6[%c18_46, %c0_47] : memref<34x128xf32, #tpu.memory_space<vmem>>, vector<8x128xf32>
    tpu.vector_store %arg6[%c18_46, %c0_47], %54 {strides = array<i32>} : memref<34x128xf32, #tpu.memory_space<vmem>>, vector<8x128xf32>,
    %c0_48 = arith.constant 0 : index
    %c0_49 = arith.constant 0 : index
    %60 = vector.load %arg6[%c0_48, %c0_49] : memref<34x128xf32, #tpu.memory_space<vmem>>, vector<8x128xf32>
    %c1_50 = arith.constant 1 : index
    %c0_51 = arith.constant 0 : index
    %61 = vector.load %arg6[%c1_50, %c0_51] : memref<34x128xf32, #tpu.memory_space<vmem>>, vector<8x128xf32>
    %c2_52 = arith.constant 2 : index
    %c0_53 = arith.constant 0 : index
    %62 = vector.load %arg6[%c2_52, %c0_53] : memref<34x128xf32, #tpu.memory_space<vmem>>, vector<8x128xf32>
    %63 = tpu.concatenate %60, %61, %62 in 1 : vector<8x128xf32>, vector<8x128xf32>, vector<8x128xf32> -> vector<8x384xf32>
    %c17_54 = arith.constant 17 : index
    %c0_55 = arith.constant 0 : index
    %64 = vector.load %arg6[%c17_54, %c0_55] : memref<34x128xf32, #tpu.memory_space<vmem>>, vector<8x128xf32>
    %c18_56 = arith.constant 18 : index
    %c0_57 = arith.constant 0 : index
    %65 = vector.load %arg6[%c18_56, %c0_57] : memref<34x128xf32, #tpu.memory_space<vmem>>, vector<8x128xf32>
    %c19_58 = arith.constant 19 : index
    %c0_59 = arith.constant 0 : index
    %66 = vector.load %arg6[%c19_58, %c0_59] : memref<34x128xf32, #tpu.memory_space<vmem>>, vector<8x128xf32>
    %67 = tpu.concatenate %64, %65, %66 in 1 : vector<8x128xf32>, vector<8x128xf32>, vector<8x128xf32> -> vector<8x384xf32>
    %68 = tpu.concatenate %63, %67 in 0 : vector<8x384xf32>, vector<8x384xf32> -> vector<16x384xf32>
    %69 = arith.truncf %68 : vector<16x384xf32> to vector<16x384xbf16>
    %c0_60 = arith.constant 0 : index
    %c0_61 = arith.constant 0 : index
    %70 = vector.load %arg3[%c0_60, %c0_61] : memref<384x128xbf16, #tpu.memory_space<vmem>>, vector<384x128xbf16>
    %cst_62 = arith.constant dense<0.000000e+00> : vector<16x128xf32>
    %71 = tpu.matmul %69, %70, %cst_62 {dimension_numbers = #tpu.dot_dimension_numbers<[1], [0], [0], [1], [0, 0, 1, 1], [], []>} : vector<16x384xbf16>, vector<384x128xbf16>, vector<16x128xf32> -> vector<16x128xf32>
    %72 = vector.broadcast %5 : vector<1x128xf32> to vector<16x128xf32>
    %73 = arith.addf %71, %72 : vector<16x128xf32>
    %c0_63 = arith.constant 0 : index
    %c0_64 = arith.constant 0 : index
    %c0_65 = arith.constant 0 : index
    %74 = vector.load %arg1[%c0_63, %c0_64, %c0_65] : memref<2x16x128xf32, #tpu.memory_space<vmem>>, vector<1x16x128xf32>
    %75 = vector.shape_cast %74 : vector<1x16x128xf32> to vector<16x128xf32>
    %cst_66 = arith.constant 0.000000e+00 : f32
    %76 = vector.broadcast %cst_66 : f32 to vector<1x128xf32>
    %c16_67 = arith.constant 16 : index
    %c0_68 = arith.constant 0 : index
    %77 = vector.load %arg6[%c16_67, %c0_68] : memref<34x128xf32, #tpu.memory_space<vmem>>, vector<1x128xf32>
    tpu.vector_store %arg6[%c16_67, %c0_68], %76 {strides = array<i32>} : memref<34x128xf32, #tpu.memory_space<vmem>>, vector<1x128xf32>,
    %c0_69 = arith.constant 0 : index
    %c0_70 = arith.constant 0 : index
    %78 = vector.load %arg6[%c0_69, %c0_70] : memref<34x128xf32, #tpu.memory_space<vmem>>, vector<16x128xf32>
    tpu.vector_store %arg6[%c0_69, %c0_70], %75 {strides = array<i32>} : memref<34x128xf32, #tpu.memory_space<vmem>>, vector<16x128xf32>,
    %c0_71 = arith.constant 0 : index
    %c0_72 = arith.constant 0 : index
    %79 = tpu.strided_load %arg6[%c0_71, %c0_72] {strides = array<i32: 2, 1>} : memref<34x128xf32, #tpu.memory_space<vmem>>, vector<8x128xf32>
    %c1_73 = arith.constant 1 : index
    %c0_74 = arith.constant 0 : index
    %80 = tpu.strided_load %arg6[%c1_73, %c0_74] {strides = array<i32: 2, 1>} : memref<34x128xf32, #tpu.memory_space<vmem>>, vector<8x128xf32>
    %81 = arith.maximumf %79, %80 : vector<8x128xf32>
    %82 = vector.extract_strided_slice %73 {offsets = [0, 0], sizes = [8, 128], strides = [1, 1]} : vector<16x128xf32> to vector<8x128xf32>
    %83 = arith.addf %82, %81 : vector<8x128xf32>
    %c0_75 = arith.constant 0 : index
    %c0_76 = arith.constant 0 : index
    %c0_77 = arith.constant 0 : index
    %84 = vector.load %arg5[%c0_75, %c0_76, %c0_77] : memref<2x8x128xf32, #tpu.memory_space<vmem>>, vector<1x8x128xf32>
    %85 = vector.shape_cast %84 : vector<1x8x128xf32> to vector<8x128xf32>
    %86 = vector.shape_cast %83 : vector<8x128xf32> to vector<1x8x128xf32>
    tpu.vector_store %arg5[%c0_75, %c0_76, %c0_77], %86 {strides = array<i32>} : memref<2x8x128xf32, #tpu.memory_space<vmem>>, vector<1x8x128xf32>,
    %c1_78 = arith.constant 1 : index
    %c0_79 = arith.constant 0 : index
    %c0_80 = arith.constant 0 : index
    %87 = vector.load %arg1[%c1_78, %c0_79, %c0_80] : memref<2x16x128xf32, #tpu.memory_space<vmem>>, vector<1x16x128xf32>
    %88 = vector.shape_cast %87 : vector<1x16x128xf32> to vector<16x128xf32>
    %cst_81 = arith.constant 0.000000e+00 : f32
    %89 = vector.broadcast %cst_81 : f32 to vector<1x128xf32>
    %c33_82 = arith.constant 33 : index
    %c0_83 = arith.constant 0 : index
    %90 = vector.load %arg6[%c33_82, %c0_83] : memref<34x128xf32, #tpu.memory_space<vmem>>, vector<1x128xf32>
    tpu.vector_store %arg6[%c33_82, %c0_83], %89 {strides = array<i32>} : memref<34x128xf32, #tpu.memory_space<vmem>>, vector<1x128xf32>,
    %c17_84 = arith.constant 17 : index
    %c0_85 = arith.constant 0 : index
    %91 = vector.load %arg6[%c17_84, %c0_85] : memref<34x128xf32, #tpu.memory_space<vmem>>, vector<16x128xf32>
    tpu.vector_store %arg6[%c17_84, %c0_85], %88 {strides = array<i32>} : memref<34x128xf32, #tpu.memory_space<vmem>>, vector<16x128xf32>,
    %c17_86 = arith.constant 17 : index
    %c0_87 = arith.constant 0 : index
    %92 = tpu.strided_load %arg6[%c17_86, %c0_87] {strides = array<i32: 2, 1>} : memref<34x128xf32, #tpu.memory_space<vmem>>, vector<8x128xf32>
    %c18_88 = arith.constant 18 : index
    %c0_89 = arith.constant 0 : index
    %93 = tpu.strided_load %arg6[%c18_88, %c0_89] {strides = array<i32: 2, 1>} : memref<34x128xf32, #tpu.memory_space<vmem>>, vector<8x128xf32>
    %94 = arith.maximumf %92, %93 : vector<8x128xf32>
    %95 = vector.extract_strided_slice %73 {offsets = [8, 0], sizes = [8, 128], strides = [1, 1]} : vector<16x128xf32> to vector<8x128xf32>
    %96 = arith.addf %95, %94 : vector<8x128xf32>
    %c1_90 = arith.constant 1 : index
    %c0_91 = arith.constant 0 : index
    %c0_92 = arith.constant 0 : index
    %97 = vector.load %arg5[%c1_90, %c0_91, %c0_92] : memref<2x8x128xf32, #tpu.memory_space<vmem>>, vector<1x8x128xf32>
    %98 = vector.shape_cast %97 : vector<1x8x128xf32> to vector<8x128xf32>
    %99 = vector.shape_cast %96 : vector<8x128xf32> to vector<1x8x128xf32>
    tpu.vector_store %arg5[%c1_90, %c0_91, %c0_92], %99 {strides = array<i32>} : memref<2x8x128xf32, #tpu.memory_space<vmem>>, vector<1x8x128xf32>,
    return
  }
  func.func @transform_0(%arg0: i32) -> (i32, i32, i32) {
    %c0_i32 = arith.constant 0 : i32
    %c0_i32_0 = arith.constant 0 : i32
    %c0_i32_1 = arith.constant 0 : i32
    return %arg0, %c0_i32, %c0_i32_0 : i32, i32, i32
  }
  func.func @transform_1(%arg0: i32) -> (i32, i32) {
    %c0_i32 = arith.constant 0 : i32
    %c0_i32_0 = arith.constant 0 : i32
    %c0_i32_1 = arith.constant 0 : i32
    return %c0_i32, %c0_i32_0 : i32, i32
  }
  func.func @transform_2(%arg0: i32) -> (i32, i32) {
    %c0_i32 = arith.constant 0 : i32
    %c0_i32_0 = arith.constant 0 : i32
    %c0_i32_1 = arith.constant 0 : i32
    return %c0_i32, %c0_i32_0 : i32, i32
  }
  func.func @transform_3(%arg0: i32) -> (i32, i32) {
    %c0_i32 = arith.constant 0 : i32
    %c0_i32_0 = arith.constant 0 : i32
    %c0_i32_1 = arith.constant 0 : i32
    return %c0_i32, %c0_i32_0 : i32, i32
  }
  func.func @transform_4(%arg0: i32) -> (i32, i32, i32) {
    %c0_i32 = arith.constant 0 : i32
    %c0_i32_0 = arith.constant 0 : i32
    %c0_i32_1 = arith.constant 0 : i32
    return %arg0, %c0_i32, %c0_i32_0 : i32, i32, i32
  }
}

</mosaic_0001>

<llo_original>
// kernel: basic_block_forward.1
$region0: #{basic_block_forward.1}
  #allocation0 [shape = 'u32[]', space=smem, size = 0x4, offset = 0x4, fixed_abs, tag = 'smem constant byte address 0x4 - core index']
  #allocation1 [shape = 'u32[72,128]{1,0:T(1,128)}', space=vmem, size = 0x9000, scoped, tag = 'internal scratch']
  #allocation2 [shape = 'f32[34,128]{1,0:T(8,128)}', space=vmem, size = 0x5000, scoped, tag = 'scratch operand']
  %s0 = inlined_call_operand.vmem [shape: f32[2,16,128], index: 0, kind: input, shape index: {}]
  %s1 = inlined_call_operand.vmem [shape: bf16[384,128], index: 1, kind: input, shape index: {}]
  %s2 = inlined_call_operand.vmem [shape: bf16[384,128], index: 2, kind: input, shape index: {}]
  %s3 = inlined_call_operand.vmem [shape: f32[8,128], index: 3, kind: input, shape index: {}]
  %s4 = inlined_call_operand.vmem [shape: f32[2,8,128], index: 4, kind: output, shape index: {}]
  %s5 = sld [smem:[#allocation0]]
  $region26: #{basic_block_forward.1} parent=0
    _
  %s7 = ssub.s32 1, %s5
  %s8 = scalar_select 0, %s7, %s5
  // Predicated region
  $region2: #{basic_block_forward.1} parent=0 // pred_check
    _
  $region3: #{basic_block_forward.1} parent=0 // pred_check_branch
    %10 = sbr.rel (0) target = $region5
  $region4: #{basic_block_forward.1} parent=0 // pred_region
    _
  $region5: #{basic_block_forward.1} parent=0 // pred_fallthru
    _
  // Predicated region
  $region6: #{basic_block_forward.1} parent=0 // pred_check
    _
  $region7: #{basic_block_forward.1} parent=0 // pred_check_branch
    %12 = sbr.rel (0) target = $region9
  $region8: #{basic_block_forward.1} parent=0 // pred_region
    _
  $region9: #{basic_block_forward.1} parent=0 // pred_fallthru
    _
  // Predicated region
  $region10: #{basic_block_forward.1} parent=0 // pred_check
    _
  $region11: #{basic_block_forward.1} parent=0 // pred_check_branch
    %14 = sbr.rel (0) target = $region13
  $region12: #{basic_block_forward.1} parent=0 // pred_region
    _
  $region13: #{basic_block_forward.1} parent=0 // pred_fallthru
    _
  // Predicated region
  $region14: #{basic_block_forward.1} parent=0 // pred_check
    _
  $region15: #{basic_block_forward.1} parent=0 // pred_check_branch
    %16 = sbr.rel (0) target = $region17
  $region16: #{basic_block_forward.1} parent=0 // pred_region
    _
  $region17: #{basic_block_forward.1} parent=0 // pred_fallthru
    _
  %v17 = vld [vmem:[%s3] sm:$0x1]
  %v18 = vld [vmem:[%s3 + $0x1] sm:$0x1]
  %v19 = vld [vmem:[%s3 + $0x2] sm:$0x1]
  %v20 = vld [vmem:[%s3 + $0x3] sm:$0x1]
  %v21 = vld [vmem:[%s3 + $0x4] sm:$0x1]
  %v22 = vld [vmem:[%s3 + $0x5] sm:$0x1]
  %v23 = vld [vmem:[%s0] sm:$0xff]
  %v24 = vld [vmem:[%s0 + $0x8] sm:$0xff]
  %v25 = vperm.slane %v17, 0
  %v26 = vmul.f32 %v23, %v25
  %v27 = vmul.f32 %v24, %v25
  %v28 = vperm.slane %v18, 0
  %v29 = vadd.f32 %v26, %v28
  %v30 = vadd.f32 %v27, %v28
  %v31 = vmax.f32 %v29, 0.0
  %v32 = vmax.f32 %v30, 0.0
  %33 = vst [vmem:[#allocation2 + $0x10] sm:$0x1] 0.0
  %34 = vst [vmem:[#allocation2] sm:$0xff] %v31
  %35 = vst [vmem:[#allocation2 + $0x8] sm:$0xff] %v32
  %s36 = scalar_lea.vmem %s0, 16
  %v37 = vld [vmem:[%s36] sm:$0xff]
  %v38 = vld [vmem:[%s36 + $0x8] sm:$0xff]
  %v39 = vmul.f32 %v37, %v25
  %v40 = vmul.f32 %v38, %v25
  %v41 = vadd.f32 %v39, %v28
  %v42 = vadd.f32 %v40, %v28
  %v43 = vmax.f32 %v41, 0.0
  %v44 = vmax.f32 %v42, 0.0
  %45 = vst [vmem:[#allocation2 + $0x21] sm:$0x1] 0.0
  %46 = vst [vmem:[#allocation2 + $0x11] sm:$0xff] %v43
  %47 = vst [vmem:[#allocation2 + $0x19] sm:$0xff] %v44
  %v48 = vld [vmem:[#allocation2] ss:$2 sm:$0xff]
  %s49 = scalar_lea.vmem [#allocation2], 1
  %v50 = vld [vmem:[%s49] ss:$2 sm:$0xff]
  %s51 = scalar_lea.vmem [#allocation2], 2
  %v52 = vld [vmem:[%s51] ss:$2 sm:$0xff]
  %s53 = scalar_lea.vmem [#allocation2], 17
  %v54 = vld [vmem:[%s53] ss:$2 sm:$0xff]
  %s55 = scalar_lea.vmem [#allocation2], 18
  %v56 = vld [vmem:[%s55] ss:$2 sm:$0xff]
  %s57 = scalar_lea.vmem [#allocation2], 19
  %v58 = vld [vmem:[%s57] ss:$2 sm:$0xff]
  %v59 = vpack.c.bf16 %v54, %v48
  %v60 = vpack.c.bf16 %v56, %v50
  %v61 = vpack.c.bf16 %v58, %v52
  %v62 = vld [vmem:[%s1] sm:$0xf]
  %v63 = vld [vmem:[%s1 + $0x4] sm:$0xf]
  %v64 = vld [vmem:[%s1 + $0x8] sm:$0xf]
  %v65 = vld [vmem:[%s1 + $0xc] sm:$0xf]
  %v66 = vld [vmem:[%s1 + $0x10] sm:$0xf]
  %v67 = vld [vmem:[%s1 + $0x14] sm:$0xf]
  %v68 = vld [vmem:[%s1 + $0x18] sm:$0xf]
  %v69 = vld [vmem:[%s1 + $0x1c] sm:$0xf]
  %v70 = vld [vmem:[%s1 + $0x20] sm:$0xf]
  %v71 = vld [vmem:[%s1 + $0x24] sm:$0xf]
  %v72 = vld [vmem:[%s1 + $0x28] sm:$0xf]
  %v73 = vld [vmem:[%s1 + $0x2c] sm:$0xf]
  %v74 = vld [vmem:[%s1 + $0x30] sm:$0xf]
  %v75 = vld [vmem:[%s1 + $0x34] sm:$0xf]
  %v76 = vld [vmem:[%s1 + $0x38] sm:$0xf]
  %v77 = vld [vmem:[%s1 + $0x3c] sm:$0xf]
  %v78 = vld [vmem:[%s1 + $0x40] sm:$0xf]
  %v79 = vld [vmem:[%s1 + $0x44] sm:$0xf]
  %v80 = vld [vmem:[%s1 + $0x48] sm:$0xf]
  %v81 = vld [vmem:[%s1 + $0x4c] sm:$0xf]
  %v82 = vld [vmem:[%s1 + $0x50] sm:$0xf]
  %v83 = vld [vmem:[%s1 + $0x54] sm:$0xf]
  %v84 = vld [vmem:[%s1 + $0x58] sm:$0xf]
  %v85 = vld [vmem:[%s1 + $0x5c] sm:$0xf]
  %v86 = vld [vmem:[%s1 + $0x60] sm:$0xf]
  %v87 = vld [vmem:[%s1 + $0x64] sm:$0xf]
  %v88 = vld [vmem:[%s1 + $0x68] sm:$0xf]
  %v89 = vld [vmem:[%s1 + $0x6c] sm:$0xf]
  %v90 = vld [vmem:[%s1 + $0x70] sm:$0xf]
  %v91 = vld [vmem:[%s1 + $0x74] sm:$0xf]
  %v92 = vld [vmem:[%s1 + $0x78] sm:$0xf]
  %v93 = vld [vmem:[%s1 + $0x7c] sm:$0xf]
  %v94 = vld [vmem:[%s1 + $0x80] sm:$0xf]
  %v95 = vld [vmem:[%s1 + $0x84] sm:$0xf]
  %v96 = vld [vmem:[%s1 + $0x88] sm:$0xf]
  %v97 = vld [vmem:[%s1 + $0x8c] sm:$0xf]
  %v98 = vld [vmem:[%s1 + $0x90] sm:$0xf]
  %v99 = vld [vmem:[%s1 + $0x94] sm:$0xf]
  %v100 = vld [vmem:[%s1 + $0x98] sm:$0xf]
  %v101 = vld [vmem:[%s1 + $0x9c] sm:$0xf]
  %v102 = vld [vmem:[%s1 + $0xa0] sm:$0xf]
  %v103 = vld [vmem:[%s1 + $0xa4] sm:$0xf]
  %v104 = vld [vmem:[%s1 + $0xa8] sm:$0xf]
  %v105 = vld [vmem:[%s1 + $0xac] sm:$0xf]
  %v106 = vld [vmem:[%s1 + $0xb0] sm:$0xf]
  %v107 = vld [vmem:[%s1 + $0xb4] sm:$0xf]
  %v108 = vld [vmem:[%s1 + $0xb8] sm:$0xf]
  %v109 = vld [vmem:[%s1 + $0xbc] sm:$0xf]
  %v110 = vperm.slane %v19, 0
  %v159 = vunpack.c.l.b16 %v62
  %v160 = vunpack.c.l.b16 %v63
  %v161 = vunpack.c.l.b16 %v64
  %v162 = vunpack.c.l.b16 %v65
  %v163 = vunpack.c.l.b16 %v66
  %v164 = vunpack.c.l.b16 %v67
  %v165 = vunpack.c.l.b16 %v68
  %v166 = vunpack.c.l.b16 %v69
  %v167 = vunpack.c.l.b16 %v70
  %v168 = vunpack.c.l.b16 %v71
  %v169 = vunpack.c.l.b16 %v72
  %v170 = vunpack.c.l.b16 %v73
  %v171 = vunpack.c.l.b16 %v74
  %v172 = vunpack.c.l.b16 %v75
  %v173 = vunpack.c.l.b16 %v76
  %v174 = vunpack.c.l.b16 %v77
  %v175 = vunpack.c.l.b16 %v78
  %v176 = vunpack.c.l.b16 %v79
  %v177 = vunpack.c.l.b16 %v80
  %v178 = vunpack.c.l.b16 %v81
  %v179 = vunpack.c.l.b16 %v82
  %v180 = vunpack.c.l.b16 %v83
  %v181 = vunpack.c.l.b16 %v84
  %v182 = vunpack.c.l.b16 %v85
  %v183 = vunpack.c.l.b16 %v86
  %v184 = vunpack.c.l.b16 %v87
  %v185 = vunpack.c.l.b16 %v88
  %v186 = vunpack.c.l.b16 %v89
  %v187 = vunpack.c.l.b16 %v90
  %v188 = vunpack.c.l.b16 %v91
  %v189 = vunpack.c.l.b16 %v92
  %v190 = vunpack.c.l.b16 %v93
  %v191 = vunpack.c.l.b16 %v94
  %v192 = vunpack.c.l.b16 %v95
  %v193 = vunpack.c.l.b16 %v96
  %v194 = vunpack.c.l.b16 %v97
  %v195 = vunpack.c.l.b16 %v98
  %v196 = vunpack.c.l.b16 %v99
  %v197 = vunpack.c.l.b16 %v100
  %v198 = vunpack.c.l.b16 %v101
  %v199 = vunpack.c.l.b16 %v102
  %v200 = vunpack.c.l.b16 %v103
  %v201 = vunpack.c.l.b16 %v104
  %v202 = vunpack.c.l.b16 %v105
  %v203 = vunpack.c.l.b16 %v106
  %v204 = vunpack.c.l.b16 %v107
  %v205 = vunpack.c.l.b16 %v108
  %v206 = vunpack.c.l.b16 %v109
  %v207 = vpack.c.b16 %v160, %v159
  %v208 = vpack.c.b16 %v162, %v161
  %v209 = vpack.c.b16 %v164, %v163
  %v210 = vpack.c.b16 %v166, %v165
  %v211 = vpack.c.b16 %v168, %v167
  %v212 = vpack.c.b16 %v170, %v169
  %v213 = vpack.c.b16 %v172, %v171
  %v214 = vpack.c.b16 %v174, %v173
  %v215 = vpack.c.b16 %v176, %v175
  %v216 = vpack.c.b16 %v178, %v177
  %v217 = vpack.c.b16 %v180, %v179
  %v218 = vpack.c.b16 %v182, %v181
  %v219 = vpack.c.b16 %v184, %v183
  %v220 = vpack.c.b16 %v186, %v185
  %v221 = vpack.c.b16 %v188, %v187
  %v222 = vpack.c.b16 %v190, %v189
  %v223 = vpack.c.b16 %v192, %v191
  %v224 = vpack.c.b16 %v194, %v193
  %v225 = vpack.c.b16 %v196, %v195
  %v226 = vpack.c.b16 %v198, %v197
  %v227 = vpack.c.b16 %v200, %v199
  %v228 = vpack.c.b16 %v202, %v201
  %v229 = vpack.c.b16 %v204, %v203
  %v230 = vpack.c.b16 %v206, %v205
  %255 = vmatpush.bf16.msra.mxu0 %v214
  %256 = vmatpush.bf16.msra.mxu0 %v213
  %257 = vmatpush.bf16.msra.mxu0 %v212
  %258 = vmatpush.bf16.msra.mxu0 %v211
  %259 = vmatpush.bf16.msra.mxu0 %v210
  %260 = vmatpush.bf16.msra.mxu0 %v209
  %261 = vmatpush.bf16.msra.mxu0 %v208
  %262 = vmatpush.bf16.msra.mxu0 %v207
  %263 = vmatmul.bf16.gmra.mxu0 %v59
  %v264 = vpop.f32.mrf.mxu0
  %v265 = vadd.f32 %v110, %v264
  %v266 = vpop.f32.mrf.mxu0
  %v267 = vadd.f32 %v110, %v266
  %268 = vdwg.mxu0
  %269 = vmatpush.bf16.msra.mxu0 %v222
  %270 = vmatpush.bf16.msra.mxu0 %v221
  %271 = vmatpush.bf16.msra.mxu0 %v220
  %272 = vmatpush.bf16.msra.mxu0 %v219
  %273 = vmatpush.bf16.msra.mxu0 %v218
  %274 = vmatpush.bf16.msra.mxu0 %v217
  %275 = vmatpush.bf16.msra.mxu0 %v216
  %276 = vmatpush.bf16.msra.mxu0 %v215
  %277 = vmatmul.bf16.gmra.mxu0 %v60
  %v278 = vpop.f32.mrf.mxu0
  %v279 = vadd.f32 %v265, %v278
  %v280 = vpop.f32.mrf.mxu0
  %v281 = vadd.f32 %v267, %v280
  %282 = vdwg.mxu0
  %283 = vmatpush.bf16.msra.mxu0 %v230
  %284 = vmatpush.bf16.msra.mxu0 %v229
  %285 = vmatpush.bf16.msra.mxu0 %v228
  %286 = vmatpush.bf16.msra.mxu0 %v227
  %287 = vmatpush.bf16.msra.mxu0 %v226
  %288 = vmatpush.bf16.msra.mxu0 %v225
  %289 = vmatpush.bf16.msra.mxu0 %v224
  %290 = vmatpush.bf16.msra.mxu0 %v223
  %291 = vmatmul.bf16.gmra.mxu0 %v61
  %v292 = vpop.f32.mrf.mxu0
  %v293 = vadd.f32 %v279, %v292
  %v294 = vpop.f32.mrf.mxu0
  %v295 = vadd.f32 %v281, %v294
  %296 = vdwg.mxu0
  %v297 = vperm.slane %v20, 0
  %v298 = vmul.f32 %v293, %v297
  %v299 = vmul.f32 %v295, %v297
  %v300 = vperm.slane %v21, 0
  %v301 = vadd.f32 %v298, %v300
  %v302 = vadd.f32 %v299, %v300
  %v303 = vmax.f32 %v301, 0.0
  %v304 = vmax.f32 %v302, 0.0
  %305 = vst [vmem:[#allocation2] sm:$0x1] 0.0
  %306 = vst [vmem:[#allocation2 + $0x9] sm:$0x1] 0.0
  %307 = vst [vmem:[#allocation2 + $0x1] sm:$0xff] %v303
  %308 = vst [vmem:[#allocation2 + $0x11] sm:$0x1] 0.0
  %309 = vst [vmem:[#allocation2 + $0x1a] sm:$0x1] 0.0
  %310 = vst [vmem:[#allocation2 + $0x12] sm:$0xff] %v304
  %v311 = vld [vmem:[#allocation2] sm:$0xff]
  %v312 = vld [vmem:[#allocation2 + $0x1] sm:$0xff]
  %v313 = vld [vmem:[#allocation2 + $0x2] sm:$0xff]
  %v314 = vld [vmem:[#allocation2 + $0x11] sm:$0xff]
  %v315 = vld [vmem:[#allocation2 + $0x12] sm:$0xff]
  %v316 = vld [vmem:[#allocation2 + $0x13] sm:$0xff]
  %v317 = vpack.c.bf16 %v314, %v311
  %v318 = vpack.c.bf16 %v315, %v312
  %v319 = vpack.c.bf16 %v316, %v313
  %v320 = vld [vmem:[%s2] sm:$0xf]
  %v321 = vld [vmem:[%s2 + $0x4] sm:$0xf]
  %v322 = vld [vmem:[%s2 + $0x8] sm:$0xf]
  %v323 = vld [vmem:[%s2 + $0xc] sm:$0xf]
  %v324 = vld [vmem:[%s2 + $0x10] sm:$0xf]
  %v325 = vld [vmem:[%s2 + $0x14] sm:$0xf]
  %v326 = vld [vmem:[%s2 + $0x18] sm:$0xf]
  %v327 = vld [vmem:[%s2 + $0x1c] sm:$0xf]
  %v328 = vld [vmem:[%s2 + $0x20] sm:$0xf]
  %v329 = vld [vmem:[%s2 + $0x24] sm:$0xf]
  %v330 = vld [vmem:[%s2 + $0x28] sm:$0xf]
  %v331 = vld [vmem:[%s2 + $0x2c] sm:$0xf]
  %v332 = vld [vmem:[%s2 + $0x30] sm:$0xf]
  %v333 = vld [vmem:[%s2 + $0x34] sm:$0xf]
  %v334 = vld [vmem:[%s2 + $0x38] sm:$0xf]
  %v335 = vld [vmem:[%s2 + $0x3c] sm:$0xf]
  %v336 = vld [vmem:[%s2 + $0x40] sm:$0xf]
  %v337 = vld [vmem:[%s2 + $0x44] sm:$0xf]
  %v338 = vld [vmem:[%s2 + $0x48] sm:$0xf]
  %v339 = vld [vmem:[%s2 + $0x4c] sm:$0xf]
  %v340 = vld [vmem:[%s2 + $0x50] sm:$0xf]
  %v341 = vld [vmem:[%s2 + $0x54] sm:$0xf]
  %v342 = vld [vmem:[%s2 + $0x58] sm:$0xf]
  %v343 = vld [vmem:[%s2 + $0x5c] sm:$0xf]
  %v344 = vld [vmem:[%s2 + $0x60] sm:$0xf]
  %v345 = vld [vmem:[%s2 + $0x64] sm:$0xf]
  %v346 = vld [vmem:[%s2 + $0x68] sm:$0xf]
  %v347 = vld [vmem:[%s2 + $0x6c] sm:$0xf]
  %v348 = vld [vmem:[%s2 + $0x70] sm:$0xf]
  %v349 = vld [vmem:[%s2 + $0x74] sm:$0xf]
  %v350 = vld [vmem:[%s2 + $0x78] sm:$0xf]
  %v351 = vld [vmem:[%s2 + $0x7c] sm:$0xf]
  %v352 = vld [vmem:[%s2 + $0x80] sm:$0xf]
  %v353 = vld [vmem:[%s2 + $0x84] sm:$0xf]
  %v354 = vld [vmem:[%s2 + $0x88] sm:$0xf]
  %v355 = vld [vmem:[%s2 + $0x8c] sm:$0xf]
  %v356 = vld [vmem:[%s2 + $0x90] sm:$0xf]
  %v357 = vld [vmem:[%s2 + $0x94] sm:$0xf]
  %v358 = vld [vmem:[%s2 + $0x98] sm:$0xf]
  %v359 = vld [vmem:[%s2 + $0x9c] sm:$0xf]
  %v360 = vld [vmem:[%s2 + $0xa0] sm:$0xf]
  %v361 = vld [vmem:[%s2 + $0xa4] sm:$0xf]
  %v362 = vld [vmem:[%s2 + $0xa8] sm:$0xf]
  %v363 = vld [vmem:[%s2 + $0xac] sm:$0xf]
  %v364 = vld [vmem:[%s2 + $0xb0] sm:$0xf]
  %v365 = vld [vmem:[%s2 + $0xb4] sm:$0xf]
  %v366 = vld [vmem:[%s2 + $0xb8] sm:$0xf]
  %v367 = vld [vmem:[%s2 + $0xbc] sm:$0xf]
  %v368 = vperm.slane %v22, 0
  %v417 = vunpack.c.l.b16 %v320
  %v418 = vunpack.c.l.b16 %v321
  %v419 = vunpack.c.l.b16 %v322
  %v420 = vunpack.c.l.b16 %v323
  %v421 = vunpack.c.l.b16 %v324
  %v422 = vunpack.c.l.b16 %v325
  %v423 = vunpack.c.l.b16 %v326
  %v424 = vunpack.c.l.b16 %v327
  %v425 = vunpack.c.l.b16 %v328
  %v426 = vunpack.c.l.b16 %v329
  %v427 = vunpack.c.l.b16 %v330
  %v428 = vunpack.c.l.b16 %v331
  %v429 = vunpack.c.l.b16 %v332
  %v430 = vunpack.c.l.b16 %v333
  %v431 = vunpack.c.l.b16 %v334
  %v432 = vunpack.c.l.b16 %v335
  %v433 = vunpack.c.l.b16 %v336
  %v434 = vunpack.c.l.b16 %v337
  %v435 = vunpack.c.l.b16 %v338
  %v436 = vunpack.c.l.b16 %v339
  %v437 = vunpack.c.l.b16 %v340
  %v438 = vunpack.c.l.b16 %v341
  %v439 = vunpack.c.l.b16 %v342
  %v440 = vunpack.c.l.b16 %v343
  %v441 = vunpack.c.l.b16 %v344
  %v442 = vunpack.c.l.b16 %v345
  %v443 = vunpack.c.l.b16 %v346
  %v444 = vunpack.c.l.b16 %v347
  %v445 = vunpack.c.l.b16 %v348
  %v446 = vunpack.c.l.b16 %v349
  %v447 = vunpack.c.l.b16 %v350
  %v448 = vunpack.c.l.b16 %v351
  %v449 = vunpack.c.l.b16 %v352
  %v450 = vunpack.c.l.b16 %v353
  %v451 = vunpack.c.l.b16 %v354
  %v452 = vunpack.c.l.b16 %v355
  %v453 = vunpack.c.l.b16 %v356
  %v454 = vunpack.c.l.b16 %v357
  %v455 = vunpack.c.l.b16 %v358
  %v456 = vunpack.c.l.b16 %v359
  %v457 = vunpack.c.l.b16 %v360
  %v458 = vunpack.c.l.b16 %v361
  %v459 = vunpack.c.l.b16 %v362
  %v460 = vunpack.c.l.b16 %v363
  %v461 = vunpack.c.l.b16 %v364
  %v462 = vunpack.c.l.b16 %v365
  %v463 = vunpack.c.l.b16 %v366
  %v464 = vunpack.c.l.b16 %v367
  %v465 = vpack.c.b16 %v418, %v417
  %v466 = vpack.c.b16 %v420, %v419
  %v467 = vpack.c.b16 %v422, %v421
  %v468 = vpack.c.b16 %v424, %v423
  %v469 = vpack.c.b16 %v426, %v425
  %v470 = vpack.c.b16 %v428, %v427
  %v471 = vpack.c.b16 %v430, %v429
  %v472 = vpack.c.b16 %v432, %v431
  %v473 = vpack.c.b16 %v434, %v433
  %v474 = vpack.c.b16 %v436, %v435
  %v475 = vpack.c.b16 %v438, %v437
  %v476 = vpack.c.b16 %v440, %v439
  %v477 = vpack.c.b16 %v442, %v441
  %v478 = vpack.c.b16 %v444, %v443
  %v479 = vpack.c.b16 %v446, %v445
  %v480 = vpack.c.b16 %v448, %v447
  %v481 = vpack.c.b16 %v450, %v449
  %v482 = vpack.c.b16 %v452, %v451
  %v483 = vpack.c.b16 %v454, %v453
  %v484 = vpack.c.b16 %v456, %v455
  %v485 = vpack.c.b16 %v458, %v457
  %v486 = vpack.c.b16 %v460, %v459
  %v487 = vpack.c.b16 %v462, %v461
  %v488 = vpack.c.b16 %v464, %v463
  %513 = vmatpush.bf16.msra.mxu0 %v472
  %514 = vmatpush.bf16.msra.mxu0 %v471
  %515 = vmatpush.bf16.msra.mxu0 %v470
  %516 = vmatpush.bf16.msra.mxu0 %v469
  %517 = vmatpush.bf16.msra.mxu0 %v468
  %518 = vmatpush.bf16.msra.mxu0 %v467
  %519 = vmatpush.bf16.msra.mxu0 %v466
  %520 = vmatpush.bf16.msra.mxu0 %v465
  %521 = vmatmul.bf16.gmra.mxu0 %v317
  %v522 = vpop.f32.mrf.mxu0
  %v523 = vadd.f32 %v368, %v522
  %v524 = vpop.f32.mrf.mxu0
  %v525 = vadd.f32 %v368, %v524
  %526 = vdwg.mxu0
  %527 = vmatpush.bf16.msra.mxu0 %v480
  %528 = vmatpush.bf16.msra.mxu0 %v479
  %529 = vmatpush.bf16.msra.mxu0 %v478
  %530 = vmatpush.bf16.msra.mxu0 %v477
  %531 = vmatpush.bf16.msra.mxu0 %v476
  %532 = vmatpush.bf16.msra.mxu0 %v475
  %533 = vmatpush.bf16.msra.mxu0 %v474
  %534 = vmatpush.bf16.msra.mxu0 %v473
  %535 = vmatmul.bf16.gmra.mxu0 %v318
  %v536 = vpop.f32.mrf.mxu0
  %v537 = vadd.f32 %v523, %v536
  %v538 = vpop.f32.mrf.mxu0
  %v539 = vadd.f32 %v525, %v538
  %540 = vdwg.mxu0
  %541 = vmatpush.bf16.msra.mxu0 %v488
  %542 = vmatpush.bf16.msra.mxu0 %v487
  %543 = vmatpush.bf16.msra.mxu0 %v486
  %544 = vmatpush.bf16.msra.mxu0 %v485
  %545 = vmatpush.bf16.msra.mxu0 %v484
  %546 = vmatpush.bf16.msra.mxu0 %v483
  %547 = vmatpush.bf16.msra.mxu0 %v482
  %548 = vmatpush.bf16.msra.mxu0 %v481
  %549 = vmatmul.bf16.gmra.mxu0 %v319
  %v550 = vpop.f32.mrf.mxu0
  %v551 = vadd.f32 %v537, %v550
  %v552 = vpop.f32.mrf.mxu0
  %v553 = vadd.f32 %v539, %v552
  %554 = vdwg.mxu0
  %v555 = vld [vmem:[%s0] sm:$0xff]
  %v556 = vld [vmem:[%s0 + $0x8] sm:$0xff]
  %557 = vst [vmem:[#allocation2 + $0x10] sm:$0x1] 0.0
  %558 = vst [vmem:[#allocation2] sm:$0xff] %v555
  %559 = vst [vmem:[#allocation2 + $0x8] sm:$0xff] %v556
  %v560 = vld [vmem:[#allocation2] ss:$2 sm:$0xff]
  %v561 = vld [vmem:[%s49] ss:$2 sm:$0xff]
  %v562 = vmax.f32 %v560, %v561
  %v563 = vadd.f32 %v551, %v562
  %564 = vst [vmem:[%s4] sm:$0xff] %v563
  %v565 = vld [vmem:[%s36] sm:$0xff]
  %v566 = vld [vmem:[%s36 + $0x8] sm:$0xff]
  %567 = vst [vmem:[#allocation2 + $0x21] sm:$0x1] 0.0
  %568 = vst [vmem:[#allocation2 + $0x11] sm:$0xff] %v565
  %569 = vst [vmem:[#allocation2 + $0x19] sm:$0xff] %v566
  %v570 = vld [vmem:[%s53] ss:$2 sm:$0xff]
  %v571 = vld [vmem:[%s55] ss:$2 sm:$0xff]
  %v572 = vmax.f32 %v570, %v571
  %v573 = vadd.f32 %v553, %v572
  %s574 = scalar_lea.vmem %s4, 8
  %575 = vst [vmem:[%s574] sm:$0xff] %v573
  // Predicated region
  $region18: #{basic_block_forward.1} parent=0 // pred_check
    _
  $region19: #{basic_block_forward.1} parent=0 // pred_check_branch
    %577 = sbr.rel (0) target = $region21
  $region20: #{basic_block_forward.1} parent=0 // pred_region
    _
  $region21: #{basic_block_forward.1} parent=0 // pred_fallthru
    _
  // Predicated region
  $region22: #{basic_block_forward.1} parent=0 // pred_check
    _
  $region23: #{basic_block_forward.1} parent=0 // pred_check_branch
    %579 = sbr.rel (0) target = $region25
  $region24: #{basic_block_forward.1} parent=0 // pred_region
    _
  $region25: #{basic_block_forward.1} parent=0 // pred_fallthru
    _

</llo_original>
